<compile_context>
chip_gen: v7x
topology: tpu7x:2x2x1
jax: 0.10.0
libtpu: 0.0.40
codegen_flags: <defaults>
</compile_context>

<pallas_src>
import functools

import jax
import jax.numpy as jnp
from jax.experimental import pallas as pl
from jax.experimental.pallas import tpu as pltpu

_LANE = 128
_SUBLANE = 8


def _round_up(x, m):
    return ((x + m - 1) // m) * m


def fcn_head_kernel(x_ref, w_ref, b_ref, sm_ref, logits_ref, *, n_classes, inv_len):
    """Grid: (batch tile,) -- one fused GAP + Linear + softmax per batch tile.

    x_ref      : (tb, C, L)   activation tile in native (B, C, L) layout
    w_ref      : (C, Np)      Linear weight (N zero-padded to a lane multiple)
    b_ref      : (1, Np)      Linear bias   (zero-padded)
    sm_ref     : (tb, Np)     softmax output tile
    logits_ref : (tb, Np)     raw logits output tile
    """
    # GAP: mean over the time axis L (lane axis here) -> (tb, C).
    x = x_ref[...].astype(jnp.float32)                 # (tb, C, L)
    pooled = jnp.sum(x, axis=-1) * inv_len             # (tb, C)

    # Linear projection on the MXU + bias.
    logits = jnp.dot(pooled, w_ref[...],
                     preferred_element_type=jnp.float32) + b_ref[...]   # (tb, Np)

    # Numerically stable softmax over the true class lanes only; padded class
    # lanes are masked to -inf so they contribute exp(.) == 0.
    col = jax.lax.broadcasted_iota(jnp.int32, logits.shape, 1)
    masked = jnp.where(col < n_classes, logits, -jnp.inf)
    m = jnp.max(masked, axis=1, keepdims=True)
    e = jnp.exp(masked - m)
    denom = jnp.sum(e, axis=1, keepdims=True)
    sm = e / denom                                     # exact divide (off crit path)

    logits_ref[...] = logits.astype(logits_ref.dtype)
    sm_ref[...] = sm.astype(sm_ref.dtype)


def class_classifier_fcnhead(x, w, b, *, block_b=64, vmem_x_budget_bytes=12 << 20):
    """FCN head forward: (softmax(logits), logits).

    x : (B, C, L) activations from the FCN backbone (native PyTorch NCL layout,
        consumed directly -- no wrapper transpose or pad of x).  float32 or
        bfloat16 (bf16 halves the HBM read; accumulation stays float32).
    w : (C, N) Linear weight, b : (N,) or (1, N) Linear bias.
    Returns (softmax, logits), each (B, N) float32.
    """
    B, C, L = x.shape
    N = w.shape[-1]

    # --- batch tile size, budgeted against scoped VMEM ----------------------
    # Double-buffered x tile must stay inside the budget (12 MiB default keeps
    # us under v5e's 16 MiB default scoped VMEM; w/bias/outputs are tiny).
    row_bytes = C * L * x.dtype.itemsize
    cap = max(1, vmem_x_budget_bytes // (2 * row_bytes))
    tb = min(block_b, cap, B)
    if tb < B:
        tb = max(_SUBLANE, (tb // _SUBLANE) * _SUBLANE)   # multi-tile: sublane-aligned
        n_b = -(-B // tb)
        Bp = n_b * tb
    else:
        tb, n_b, Bp = B, 1, B

    if Bp != B:
        # TODO(synk): ragged last batch tile is zero-padded here (extra HBM
        # pass over x); pick batch sizes that divide the tile to avoid it.
        x = jnp.pad(x, ((0, Bp - B), (0, 0), (0, 0)))

    # --- lane-dense class axis (tiny weight/bias only) -----------------------
    Np = _round_up(N, _LANE)
    wp = jnp.pad(w.astype(jnp.float32), ((0, 0), (0, Np - N)))
    bp = jnp.pad(jnp.reshape(b, (1, -1)).astype(jnp.float32),
                 ((0, 0), (0, Np - N)))

    kernel = functools.partial(fcn_head_kernel,
                               n_classes=N, inv_len=1.0 / float(L))

    sm_p, logits_p = pl.pallas_call(
        kernel,
        out_shape=(
            jax.ShapeDtypeStruct((Bp, Np), jnp.float32),   # softmax
            jax.ShapeDtypeStruct((Bp, Np), jnp.float32),   # logits
        ),
        grid_spec=pltpu.PrefetchScalarGridSpec(
            num_scalar_prefetch=0,
            grid=(n_b,),
            in_specs=[
                # x tile: (tb, C, L) -- C and L at full extent (no padding)
                pl.BlockSpec((tb, C, L), lambda bi: (bi, 0, 0)),
                # weight / bias: resident, constant block index
                pl.BlockSpec((C, Np), lambda bi: (0, 0)),
                pl.BlockSpec((1, Np), lambda bi: (0, 0)),
            ],
            out_specs=(
                pl.BlockSpec((tb, Np), lambda bi: (bi, 0)),
                pl.BlockSpec((tb, Np), lambda bi: (bi, 0)),
            ),
        ),
        compiler_params=pltpu.CompilerParams(
            # batch tiles are independent (megacore-shardable on v7x)
            dimension_semantics=("parallel",),
        ),
    )(x, wp, bp)

    # strip batch / class-lane padding
    return sm_p[:B, :N], logits_p[:B, :N]


def reference(x, w, b):
    pooled = jnp.mean(x.astype(jnp.float32), axis=-1)
    logits = pooled @ w + jnp.reshape(b, (1, -1))
    return jax.nn.softmax(logits, axis=1), logits


if __name__ == "__main__":
    key = jax.random.PRNGKey(0)
    kx, kw, kx2 = jax.random.split(key, 3)

    # --- small, deliberately unaligned shapes (single batch tile) -----------
    B, C, L, N = 2, 32, 12, 2
    x = jax.random.normal(kx, (B, C, L), dtype=jnp.float32)
    w = jax.random.normal(kw, (C, N), dtype=jnp.float32) * jnp.sqrt(2.0 / C)
    b = jnp.zeros((N,), dtype=jnp.float32)

    sm, logits = class_classifier_fcnhead(x, w, b)
    jax.block_until_ready((sm, logits))

    sm_ref, logits_ref = reference(x, w, b)
    assert logits.shape == (B, N) and sm.shape == (B, N)
    assert jnp.allclose(logits, logits_ref, atol=1e-5, rtol=1e-5)
    assert jnp.allclose(sm, sm_ref, atol=1e-5, rtol=1e-5)
    assert bool(jnp.all(jnp.isfinite(sm))) and bool(jnp.all(jnp.isfinite(logits)))

    # --- multi-batch-tile path (ragged B, bf16 input) ------------------------
    B2, C2, L2, N2 = 20, 32, 24, 2
    x2 = jax.random.normal(kx2, (B2, C2, L2), dtype=jnp.float32)
    sm2, logits2 = class_classifier_fcnhead(x2.astype(jnp.bfloat16), w, b, block_b=8)
    jax.block_until_ready((sm2, logits2))
    sm2_ref, logits2_ref = reference(x2, w, b)
    assert logits2.shape == (B2, N2) and sm2.shape == (B2, N2)
    # bf16 input -> looser tolerance; accumulation is still f32
    assert jnp.allclose(logits2, logits2_ref, atol=3e-2, rtol=3e-2)
    assert jnp.allclose(sm2, sm2_ref, atol=3e-2, rtol=3e-2)
    assert bool(jnp.all(jnp.isfinite(sm2))) and bool(jnp.all(jnp.isfinite(logits2)))

    print("KERNEL_OK")
</pallas_src>

<mosaic_0001>
module attributes {stable_mosaic.version = 11 : i64} {
  func.func @fcn_head_kernel(%arg0: i32, %arg1: memref<2x32x12xf32, #tpu.memory_space<vmem>>, %arg2: memref<32x128xf32, #tpu.memory_space<vmem>>, %arg3: memref<1x128xf32, #tpu.memory_space<vmem>>, %arg4: memref<2x128xf32, #tpu.memory_space<vmem>>, %arg5: memref<2x128xf32, #tpu.memory_space<vmem>>) attributes {dimension_semantics = [#tpu.dimension_semantics<parallel>], iteration_bounds = array<i64: 1>, scalar_prefetch = 0 : i64, scratch_operands = 0 : i64, tpu.core_type = #tpu.core_type<tc>, window_params = [{transform_indices = @transform_0, window_bounds = array<i64: 2, 32, 12>}, {pipeline_mode = #tpu.pipeline_mode<synchronous>, transform_indices = @transform_1, window_bounds = array<i64: 32, 128>}, {pipeline_mode = #tpu.pipeline_mode<synchronous>, transform_indices = @transform_2, window_bounds = array<i64: 1, 128>}, {transform_indices = @transform_3, window_bounds = array<i64: 2, 128>}, {transform_indices = @transform_4, window_bounds = array<i64: 2, 128>}]} {
    %c0 = arith.constant 0 : index
    %c0_0 = arith.constant 0 : index
    %c0_1 = arith.constant 0 : index
    %0 = vector.load %arg1[%c0, %c0_0, %c0_1] : memref<2x32x12xf32, #tpu.memory_space<vmem>>, vector<2x32x12xf32>
    %cst = arith.constant dense<0.000000e+00> : vector<2x32xf32>
    %1 = vector.multi_reduction <add>, %0, %cst [2] : vector<2x32x12xf32> to vector<2x32xf32>
    %cst_2 = arith.constant 0.0833333358 : f32
    %2 = vector.broadcast %cst_2 : f32 to vector<2x32xf32>
    %3 = arith.mulf %1, %2 : vector<2x32xf32>
    %c0_3 = arith.constant 0 : index
    %c0_4 = arith.constant 0 : index
    %4 = vector.load %arg2[%c0_3, %c0_4] : memref<32x128xf32, #tpu.memory_space<vmem>>, vector<32x128xf32>
    %cst_5 = arith.constant dense<0.000000e+00> : vector<2x128xf32>
    %5 = tpu.matmul %3, %4, %cst_5 {dimension_numbers = #tpu.dot_dimension_numbers<[1], [0], [0], [1], [0, 0, 1, 1], [], []>} : vector<2x32xf32>, vector<32x128xf32>, vector<2x128xf32> -> vector<2x128xf32>
    %c0_6 = arith.constant 0 : index
    %c0_7 = arith.constant 0 : index
    %6 = vector.load %arg3[%c0_6, %c0_7] : memref<1x128xf32, #tpu.memory_space<vmem>>, vector<1x128xf32>
    %7 = vector.broadcast %6 : vector<1x128xf32> to vector<2x128xf32>
    %8 = arith.addf %5, %7 : vector<2x128xf32>
    %9 = tpu.iota {dimensions = array<i32: 1>} : vector<2x128xi32>
    %c2_i32 = arith.constant 2 : i32
    %10 = vector.broadcast %c2_i32 : i32 to vector<2x128xi32>
    %11 = arith.cmpi slt, %9, %10 : vector<2x128xi32>
    %cst_8 = arith.constant 0xFF800000 : f32
    %12 = vector.broadcast %cst_8 : f32 to vector<2x128xf32>
    %13 = arith.select %11, %8, %12 : vector<2x128xi1>, vector<2x128xf32>
    %cst_9 = arith.constant dense<0xFF800000> : vector<2xf32>
    %14 = vector.multi_reduction <maximumf>, %13, %cst_9 [1] : vector<2x128xf32> to vector<2xf32>
    %15 = vector.shape_cast %14 : vector<2xf32> to vector<2x1xf32>
    %16 = vector.broadcast %15 : vector<2x1xf32> to vector<2x128xf32>
    %17 = arith.subf %13, %16 : vector<2x128xf32>
    %18 = math.exp %17 : vector<2x128xf32>
    %cst_10 = arith.constant dense<0.000000e+00> : vector<2xf32>
    %19 = vector.multi_reduction <add>, %18, %cst_10 [1] : vector<2x128xf32> to vector<2xf32>
    %20 = vector.shape_cast %19 : vector<2xf32> to vector<2x1xf32>
    %21 = vector.broadcast %20 : vector<2x1xf32> to vector<2x128xf32>
    %22 = arith.divf %18, %21 : vector<2x128xf32>
    %c0_11 = arith.constant 0 : index
    %c0_12 = arith.constant 0 : index
    %23 = vector.load %arg5[%c0_11, %c0_12] : memref<2x128xf32, #tpu.memory_space<vmem>>, vector<2x128xf32>
    tpu.vector_store %arg5[%c0_11, %c0_12], %8 {strides = array<i32>} : memref<2x128xf32, #tpu.memory_space<vmem>>, vector<2x128xf32>,
    %c0_13 = arith.constant 0 : index
    %c0_14 = arith.constant 0 : index
    %24 = vector.load %arg4[%c0_13, %c0_14] : memref<2x128xf32, #tpu.memory_space<vmem>>, vector<2x128xf32>
    tpu.vector_store %arg4[%c0_13, %c0_14], %22 {strides = array<i32>} : memref<2x128xf32, #tpu.memory_space<vmem>>, vector<2x128xf32>,
    return
  }
  func.func @transform_0(%arg0: i32) -> (i32, i32, i32) {
    %c0_i32 = arith.constant 0 : i32
    %c0_i32_0 = arith.constant 0 : i32
    %c0_i32_1 = arith.constant 0 : i32
    return %arg0, %c0_i32, %c0_i32_0 : i32, i32, i32
  }
  func.func @transform_1(%arg0: i32) -> (i32, i32) {
    %c0_i32 = arith.constant 0 : i32
    %c0_i32_0 = arith.constant 0 : i32
    %c0_i32_1 = arith.constant 0 : i32
    return %c0_i32, %c0_i32_0 : i32, i32
  }
  func.func @transform_2(%arg0: i32) -> (i32, i32) {
    %c0_i32 = arith.constant 0 : i32
    %c0_i32_0 = arith.constant 0 : i32
    %c0_i32_1 = arith.constant 0 : i32
    return %c0_i32, %c0_i32_0 : i32, i32
  }
  func.func @transform_3(%arg0: i32) -> (i32, i32) {
    %c0_i32 = arith.constant 0 : i32
    %c0_i32_0 = arith.constant 0 : i32
    return %arg0, %c0_i32 : i32, i32
  }
  func.func @transform_4(%arg0: i32) -> (i32, i32) {
    %c0_i32 = arith.constant 0 : i32
    %c0_i32_0 = arith.constant 0 : i32
    return %arg0, %c0_i32 : i32, i32
  }
}

</mosaic_0001>

<llo_original>
// kernel: tpu_custom_call.1
$region0: #{tpu_custom_call.1}
  #allocation0 [shape = 'u32[]', space=smem, size = 0x4, offset = 0x4, fixed_abs, tag = 'smem constant byte address 0x4 - core index']
  #allocation1 [shape = 'u32[144,128]{1,0:T(1,128)}', space=vmem, size = 0x12000, scoped, tag = 'internal scratch']
  %s0 = inlined_call_operand.vmem [shape: f32[2,32,12], index: 0, kind: input, shape index: {}]
  %s1 = inlined_call_operand.vmem [shape: f32[32,128], index: 1, kind: input, shape index: {}]
  %s2 = inlined_call_operand.vmem [shape: f32[1,128], index: 2, kind: input, shape index: {}]
  %s3 = inlined_call_operand.hbm [shape: f32[2,128], index: 3, kind: output, shape index: {0}]
  %s4 = inlined_call_operand.hbm [shape: f32[2,128], index: 4, kind: output, shape index: {1}]
  %5 = xla_tuple %s3, %s4
  %s6 = sld [smem:[#allocation0]]
  $region30: #{tpu_custom_call.1} parent=0
    _
  %s8 = ssub.s32 1, %s6
  %s9 = scalar_select 0, %s8, %s6
  $region1: #{tpu_custom_call.1} parent=0
    #allocation2 [shape = 'u8[1024]{0}', space=vmem, size = 0x400, scoped, tag = 'output window, operand 0, single buffered']
    #allocation3 [shape = 's32[1]{0}', space=sflag, size = 0x4, scoped, tag = 'scoped memory for tpu_custom_call.1']
    #allocation4 [shape = 'u8[1024]{0}', space=vmem, size = 0x400, scoped, tag = 'output window, operand 1, single buffered']
    #allocation5 [shape = 's32[1]{0}', space=sflag, size = 0x4, scoped, tag = 'scoped memory for tpu_custom_call.1']
    %10 = vsyncpa [#allocation3], 0
    %11 = vsyncpa [#allocation5], 0
    // Predicated region
    $region2: #{tpu_custom_call.1} parent=1 // pred_check
      _
    $region3: #{tpu_custom_call.1} parent=1 // pred_check_branch
      %13 = sbr.rel (0) target = $region5
    $region4: #{tpu_custom_call.1} parent=1 // pred_region
      _
    $region5: #{tpu_custom_call.1} parent=1 // pred_fallthru
      _
    // Predicated region
    $region6: #{tpu_custom_call.1} parent=1 // pred_check
      _
    $region7: #{tpu_custom_call.1} parent=1 // pred_check_branch
      %15 = sbr.rel (0) target = $region9
    $region8: #{tpu_custom_call.1} parent=1 // pred_region
      _
    $region9: #{tpu_custom_call.1} parent=1 // pred_fallthru
      _
    // Predicated region
    $region10: #{tpu_custom_call.1} parent=1 // pred_check
      _
    $region11: #{tpu_custom_call.1} parent=1 // pred_check_branch
      %17 = sbr.rel (0) target = $region13
    $region12: #{tpu_custom_call.1} parent=1 // pred_region
      _
    $region13: #{tpu_custom_call.1} parent=1 // pred_fallthru
      _
    %v18 = vld [vmem:[%s0] sm:$0xff]
    %v19 = vld [vmem:[%s0 + $0x8] sm:$0xff]
    %v20 = vld [vmem:[%s0 + $0x10] sm:$0xff]
    %v21 = vld [vmem:[%s0 + $0x18] sm:$0xff]
    %v22 = vld [vmem:[%s0 + $0x20] sm:$0xff]
    %v23 = vld [vmem:[%s0 + $0x28] sm:$0xff]
    %v24 = vld [vmem:[%s0 + $0x30] sm:$0xff]
    %v25 = vld [vmem:[%s0 + $0x38] sm:$0xff]
    %vm26 = vcmask 97280
    %v27 = vsel %vm26, %v18, 0.0
    %28 = vadd.xlane.f32.xlu0 %v27
    %v29 = vpop.xlane.xlu0 %28
    %v30 = vsel %vm26, %v19, 0.0
    %31 = vadd.xlane.f32.xlu0 %v30
    %v32 = vpop.xlane.xlu0 %31
    %v33 = vsel %vm26, %v20, 0.0
    %34 = vadd.xlane.f32.xlu0 %v33
    %v35 = vpop.xlane.xlu0 %34
    %v36 = vsel %vm26, %v21, 0.0
    %37 = vadd.xlane.f32.xlu0 %v36
    %v38 = vpop.xlane.xlu0 %37
    %v39 = vsel %vm26, %v22, 0.0
    %40 = vadd.xlane.f32.xlu0 %v39
    %v41 = vpop.xlane.xlu0 %40
    %v42 = vsel %vm26, %v23, 0.0
    %43 = vadd.xlane.f32.xlu0 %v42
    %v44 = vpop.xlane.xlu0 %43
    %v45 = vsel %vm26, %v24, 0.0
    %46 = vadd.xlane.f32.xlu0 %v45
    %v47 = vpop.xlane.xlu0 %46
    %v48 = vsel %vm26, %v25, 0.0
    %49 = vadd.xlane.f32.xlu0 %v48
    %v50 = vpop.xlane.xlu0 %49
    %v51 = vmul.f32 %v29, 0.083333336
    %v52 = vmul.f32 %v32, 0.083333336
    %v53 = vmul.f32 %v35, 0.083333336
    %v54 = vmul.f32 %v38, 0.083333336
    %v55 = vmul.f32 %v41, 0.083333336
    %v56 = vmul.f32 %v44, 0.083333336
    %v57 = vmul.f32 %v47, 0.083333336
    %v58 = vmul.f32 %v50, 0.083333336
    %v59 = vld [vmem:[%s1] sm:$0xff]
    %v60 = vld [vmem:[%s1 + $0x8] sm:$0xff]
    %v61 = vld [vmem:[%s1 + $0x10] sm:$0xff]
    %v62 = vld [vmem:[%s1 + $0x18] sm:$0xff]
    %v63 = vld [vmem:[%s2] sm:$0x1]
    %v65 = vlaneseq
    %v66 = vshrl.u32 %v65, 7
    %v67 = vsub.s32 0, %v66
    %v68 = vrot.slane %v63, %v67
    %v78 = vlaneseq
    %v79 = vand.u32 %v78, 127
    %v80 = vlaneseq
    %v81 = vshrl.u32 %v80, 7
    %v82 = vsub.s32 %v79, %v81
    %v83 = vrot.slane %v51, %v82
    %v84 = vadd.s32 %v79, 4294967288
    %v85 = vlaneseq
    %v86 = vshrl.u32 %v85, 7
    %v87 = vsub.s32 %v84, %v86
    %v88 = vrot.slane %v52, %v87
    %vm89 = vcmask 130112
    %v90 = vsel %vm89, %v88, %v83
    %v91 = vadd.s32 %v79, 4294967280
    %v92 = vlaneseq
    %v93 = vshrl.u32 %v92, 7
    %v94 = vsub.s32 %v91, %v93
    %v95 = vrot.slane %v53, %v94
    %vm96 = vcmask 195712
    %v97 = vsel %vm96, %v95, %v90
    %v98 = vadd.s32 %v79, 4294967272
    %v99 = vlaneseq
    %v100 = vshrl.u32 %v99, 7
    %v101 = vsub.s32 %v98, %v100
    %v102 = vrot.slane %v54, %v101
    %vm103 = vcmask 261312
    %v104 = vsel %vm103, %v102, %v97
    %v105 = vlaneseq
    %v106 = vshrl.u32 %v105, 7
    %v107 = vsub.s32 %v79, %v106
    %v108 = vrot.slane %v55, %v107
    %v109 = vlaneseq
    %v110 = vshrl.u32 %v109, 7
    %v111 = vsub.s32 %v84, %v110
    %v112 = vrot.slane %v56, %v111
    %v113 = vsel %vm89, %v112, %v108
    %v114 = vlaneseq
    %v115 = vshrl.u32 %v114, 7
    %v116 = vsub.s32 %v91, %v115
    %v117 = vrot.slane %v57, %v116
    %v118 = vsel %vm96, %v117, %v113
    %v119 = vlaneseq
    %v120 = vshrl.u32 %v119, 7
    %v121 = vsub.s32 %v98, %v120
    %v122 = vrot.slane %v58, %v121
    %v123 = vsel %vm103, %v122, %v118
    %vm124 = vcmask 1041409
    %v125 = vsel %vm124, %v123, %v104
    %vm126 = vcmask 261120
    %v127 = vsel %vm126, %v125, 0
    %129 = vmatprep.subr.mxu0 0.0
    %130 = vmatpush1.msra.mxu0 %v59
    %131 = vmatprep.subr.mxu0 0.0
    %132 = vmatpush1.msra.mxu0 %v60
    %133 = vmatprep.subr.mxu0 0.0
    %134 = vmatpush1.msra.mxu0 %v61
    %135 = vmatprep.subr.mxu0 0.0
    %136 = vmatpush1.msra.mxu0 %v62
    %137 = vmatprep.subr.mxu0 0.0
    %138 = vmatpush1.msra.mxu0 0.0
    %139 = vmatprep.subr.mxu0 0.0
    %140 = vmatpush1.msra.mxu0 0.0
    %141 = vmatprep.subr.mxu0 0.0
    %142 = vmatpush1.msra.mxu0 0.0
    %143 = vmatprep.subr.mxu0 0.0
    %144 = vmatpush1.msra.mxu0 0.0
    %145 = vmatprep.subr.mxu0 0.0
    %146 = vmatpush1.msra.mxu0 0.0
    %147 = vmatprep.subr.mxu0 0.0
    %148 = vmatpush1.msra.mxu0 0.0
    %149 = vmatprep.subr.mxu0 0.0
    %150 = vmatpush1.msra.mxu0 0.0
    %151 = vmatprep.subr.mxu0 0.0
    %152 = vmatpush1.msra.mxu0 0.0
    %153 = vmatprep.subr.mxu0 0.0
    %154 = vmatpush1.msra.mxu0 0.0
    %155 = vmatprep.subr.mxu0 0.0
    %156 = vmatpush1.msra.mxu0 0.0
    %157 = vmatprep.subr.mxu0 0.0
    %158 = vmatpush1.msra.mxu0 0.0
    %159 = vmatprep.subr.mxu0 0.0
    %160 = vmatpush1.msra.mxu0 0.0
    %161 = vmatprep.subr.mxu0 0.0
    %162 = vmatpush1.msra.mxu0 0.0
    %163 = vmatprep.subr.mxu0 0.0
    %164 = vmatpush1.msra.mxu0 0.0
    %165 = vmatprep.subr.mxu0 0.0
    %166 = vmatpush1.msra.mxu0 0.0
    %167 = vmatprep.subr.mxu0 0.0
    %168 = vmatpush1.msra.mxu0 0.0
    %169 = vmatprep.subr.mxu0 0.0
    %170 = vmatpush1.msra.mxu0 0.0
    %171 = vmatprep.subr.mxu0 0.0
    %172 = vmatpush1.msra.mxu0 0.0
    %173 = vmatprep.subr.mxu0 0.0
    %174 = vmatpush1.msra.mxu0 0.0
    %175 = vmatprep.subr.mxu0 0.0
    %176 = vmatpush1.msra.mxu0 0.0
    %177 = vmatprep.subr.mxu0 0.0
    %178 = vmatpush1.msra.mxu0 0.0
    %179 = vmatprep.subr.mxu0 0.0
    %180 = vmatpush1.msra.mxu0 0.0
    %181 = vmatprep.subr.mxu0 0.0
    %182 = vmatpush1.msra.mxu0 0.0
    %183 = vmatprep.subr.mxu0 0.0
    %184 = vmatpush1.msra.mxu0 0.0
    %185 = vmatprep.subr.mxu0 0.0
    %186 = vmatpush1.msra.mxu0 0.0
    %187 = vmatprep.subr.mxu0 0.0
    %188 = vmatpush1.msra.mxu0 0.0
    %189 = vmatprep.subr.mxu0 0.0
    %190 = vmatpush1.msra.mxu0 0.0
    %191 = vmatprep.subr.mxu0 0.0
    %192 = vmatpush1.msra.mxu0 0.0
    %193 = vmatprep.mubr.f32.mxu0 0.0
    %194 = vmatmul.mubr.f32.gmra.mrb[0].mxu0 %v127
    %v195 = vpop.f32.mrb[0].mxu0
    %v196 = vadd.f32 %v68, %v195
    %v197 = vpop.f32.mrb[0].mxu0
    %198 = vdwg.mxu0
    %vm199 = vcmp.lt.s32.totalorder %v79, 2
    %v200 = vsel %vm199, %v196, -inf
    %vm201 = vcmask 1041408
    %v202 = vsel %vm201, %v200, -inf
    %203 = vmax.xlane.f32.xlu0 %v202
    %v204 = vpop.xlane.xlu0 %203
    %v205 = vsub.f32 %v200, %v204
    %v206 = vmul.f32 %v205, 1.442695
    %v207 = vpow.pop %v206
    %v208 = vsel %vm201, %v207, 0.0
    %209 = vadd.xlane.f32.xlu0 %v208
    %v210 = vpop.xlane.xlu0 %209
    %v211 = vrcp.pop %v210
    %v212 = vmul.f32 %v207, %v211
    %213 = vst [vmem:[#allocation4] sm:$0x3] %v196
    %214 = vst [vmem:[#allocation2] sm:$0x3] %v212
    // Predicated region
    $region14: #{tpu_custom_call.1} parent=1 // pred_check
      _
    $region15: #{tpu_custom_call.1} parent=1 // pred_check_branch
      %216 = sbr.rel (0) target = $region17
    $region16: #{tpu_custom_call.1} parent=1 // pred_region
      %s218 = ssub.s32 32, 32
      %219 = vsyncadd [#allocation3], %s218
      %s221 = sshll.u32 [#allocation2], 4
      %s222 = int_to_ptr.vmem [resolvable:$true] %s221
      %224 = dma.vmem_to_hbm [thread:$0]  %s222, 32, %s3, [#allocation3]
    $region17: #{tpu_custom_call.1} parent=1 // pred_fallthru
      _
    // Predicated region
    $region18: #{tpu_custom_call.1} parent=1 // pred_check
      _
    $region19: #{tpu_custom_call.1} parent=1 // pred_check_branch
      %226 = sbr.rel (0) target = $region21
    $region20: #{tpu_custom_call.1} parent=1 // pred_region
      %s228 = ssub.s32 32, 32
      %229 = vsyncadd [#allocation5], %s228
      %s231 = sshll.u32 [#allocation4], 4
      %s232 = int_to_ptr.vmem [resolvable:$true] %s231
      %234 = dma.vmem_to_hbm [thread:$0]  %s232, 32, %s4, [#allocation5]
    $region21: #{tpu_custom_call.1} parent=1 // pred_fallthru
      _
    // Predicated region
    $region22: #{tpu_custom_call.1} parent=1 // pred_check
      _
    $region23: #{tpu_custom_call.1} parent=1 // pred_check_branch
      %236 = sbr.rel (0) target = $region25
    $region24: #{tpu_custom_call.1} parent=1 // pred_region
      %237 = dma.done [#allocation3], 32
    $region25: #{tpu_custom_call.1} parent=1 // pred_fallthru
      _
    // Predicated region
    $region26: #{tpu_custom_call.1} parent=1 // pred_check
      _
    $region27: #{tpu_custom_call.1} parent=1 // pred_check_branch
      %239 = sbr.rel (0) target = $region29
    $region28: #{tpu_custom_call.1} parent=1 // pred_region
      %240 = dma.done [#allocation5], 32
    $region29: #{tpu_custom_call.1} parent=1 // pred_fallthru
      _
    %241 = vsyncpa [#allocation3], 1
    %242 = vsyncpa [#allocation5], 1

</llo_original>
